<compile_context>
chip_gen: v5e
topology: v5e:2x2
jax: 0.10.0
libtpu: 0.0.40
codegen_flags: <defaults>
</compile_context>

<pallas_src>
import math
import numpy as np
import jax
import jax.numpy as jnp
from jax.experimental import pallas as pl
from jax.experimental.pallas import tpu as pltpu

# ----------------------------- synthetic config -----------------------------
B = 2                        # batch
C, H, W = 4, 16, 16          # neural_state NCHW
NEURAL_FLAT = C * H * W      # 1024
HIDDEN = 32                  # neural_actor.network hidden width
L = 32                       # logic_state feature dim (flattened logic tensor)
N_PREDS = 6                  # logic_actor predicate outputs
P1 = N_PREDS + 1             # + dummy predicate column
N_ENV_ACTIONS = 6            # len(env.pred2action)
N_RAW_ACTIONS = 8            # env.n_raw_actions (> N_ENV_ACTIONS -> zero pad)
GAMMA = 0.01                 # nsfr softor temperature
LOGIT_EPS = 0.01             # torch.logit(..., eps=0.01)
LOGIT_LO = math.log(LOGIT_EPS) - math.log(1.0 - LOGIT_EPS)   # logit(eps)
LOGIT_HI = -LOGIT_LO
NEG_BIG = -1e9               # additive "-inf" for the softor mask (NaN-safe)
DUMMY_BIAS = -20.0           # sigmoid(-20) << eps  ->  clips to logit(eps)
OUT_LANES = 128              # lane-dense output slab width

# env_action_id -> predicate indices (dummy index == N_PREDS)
ACTION_TO_PRED = {0: [0], 1: [1], 2: [2, 3], 3: [4], 4: [5], 5: [N_PREDS]}

# ---- packed parameter-table layout (PTAB_ROWS x 128 lanes, f32) ----
ROW_W = 0                            # rows [0,32): lanes [0,8)=w_act, [8,17)=w_comb
COL_WACT = 0
COL_WCOMB = N_RAW_ACTIONS            # 8
NCOMB = P1 + 2                       # 9 = 6 preds + dummy + 2 blender logits
ROW_BIAS = HIDDEN                    # row 32: lanes [0,32)=b_net, [32,40)=b_act, [40,49)=b_comb
COL_BNET = 0
COL_BACT = HIDDEN
COL_BCOMB = HIDDEN + N_RAW_ACTIONS
ROW_MASK = 40                        # rows [40,48): lanes [0,7) = additive softor log-mask
PTAB_ROWS = 48                       # sublane-aligned


# --------------------------------- kernel -----------------------------------
def _blender_actor_kernel(ns_ref, ls_ref, wnet_ref, ptab_ref, out_ref):
    f32 = jnp.float32

    def softmax(x):
        m = jnp.max(x, axis=-1, keepdims=True)
        e = jnp.exp(x - m)
        return e / jnp.sum(e, axis=-1, keepdims=True)

    # ---- static, tile-aligned views into the packed parameter table ----
    wrows = ptab_ref[ROW_W:ROW_W + HIDDEN, :]                  # (32, 128)
    brow = ptab_ref[ROW_BIAS:ROW_BIAS + 1, :]                  # (1, 128)
    mrows = ptab_ref[ROW_MASK:ROW_MASK + N_RAW_ACTIONS, :]     # (8, 128)
    w_act = wrows[:, COL_WACT:COL_WACT + N_RAW_ACTIONS]        # (32, 8)
    w_comb = wrows[:, COL_WCOMB:COL_WCOMB + NCOMB]             # (32, 9)
    b_net = brow[:, COL_BNET:COL_BNET + HIDDEN]                # (1, 32)
    b_act = brow[:, COL_BACT:COL_BACT + N_RAW_ACTIONS]         # (1, 8)
    b_comb = brow[:, COL_BCOMB:COL_BCOMB + NCOMB]              # (1, 9)
    log_mask = mrows[:, 0:P1]                                  # (8, 7), 0 / -1e9

    # ---- neural branch: to_neural_action_distribution ----
    hid = jnp.dot(ns_ref[...], wnet_ref[...], preferred_element_type=f32) + b_net
    hid = jnp.maximum(hid, 0.0)
    neural_probs = softmax(jnp.dot(hid, w_act, preferred_element_type=f32) + b_act)   # (Bp, 8)

    # ---- fused logic-actor + blender head matmul ----
    z = jnp.dot(ls_ref[...], w_comb, preferred_element_type=f32) + b_comb             # (Bp, 9)

    # logic branch: torch.logit(clip(sigmoid(z), eps, 1-eps)) == clip(z, ±logit(eps));
    # the dummy predicate column has zero weights + bias -20 -> clips to logit(eps).
    raw_logits = jnp.clip(z[:, 0:P1], LOGIT_LO, LOGIT_HI)                              # (Bp, 7)

    # softor over gathered predicate logits == masked logsumexp (vectorized).
    # Pad action rows are all NEG_BIG -> finite huge-negative values -> exact 0
    # after softmax (matches reshape_action_distribution zero padding); also
    # NaN-safe if a mask row is ever empty.
    x = raw_logits * (1.0 / GAMMA)                                                     # (Bp, 7)
    xm = x[:, None, :] + log_mask[None, :, :]                                          # (Bp, 8, 7)
    mmax = jnp.max(xm, axis=-1, keepdims=True)
    lse = mmax[..., 0] + jnp.log(jnp.sum(jnp.exp(xm - mmax), axis=-1))                 # (Bp, 8)
    logic_probs = softmax(GAMMA * lse)                                                 # (Bp, 8)

    # blender (blender_mode="logic", blend_function="softmax"):
    # softmax(torch.logit(clip(softmax(zb)))) == normalized odds q/(1-q).
    q = jnp.clip(softmax(z[:, P1:P1 + 2]), LOGIT_EPS, 1.0 - LOGIT_EPS)                 # (Bp, 2)
    odds = q / (1.0 - q)
    weights = odds / jnp.sum(odds, axis=-1, keepdims=True)                             # (Bp, 2)
    # TODO(synk): blend_function="gumbel_softmax" needs in-kernel RNG (pltpu.prng_*);
    #             only the "softmax" blend function is implemented here.

    # ---- hybrid blend + single lane-dense output slab ----
    probs = weights[:, 0:1] * neural_probs + weights[:, 1:2] * logic_probs             # (Bp, 8)
    tail = jnp.zeros((probs.shape[0], OUT_LANES - N_RAW_ACTIONS - 2), f32)
    out_ref[...] = jnp.concatenate([probs, weights, tail], axis=-1)                    # (Bp, 128)


# -------------------------------- wrapper ------------------------------------
def pack_params(params):
    """Pack every small parameter into one (48, 128) f32 table (host side, once)."""
    ptab = np.zeros((PTAB_ROWS, OUT_LANES), np.float32)
    ptab[ROW_W:ROW_W + HIDDEN, COL_WACT:COL_WACT + N_RAW_ACTIONS] = np.asarray(params["w_act"])
    ptab[ROW_W:ROW_W + HIDDEN, COL_WCOMB:COL_WCOMB + N_PREDS] = np.asarray(params["w_logic"])
    # dummy predicate column (COL_WCOMB + N_PREDS) keeps zero weights
    ptab[ROW_W:ROW_W + HIDDEN, COL_WCOMB + P1:COL_WCOMB + P1 + 2] = np.asarray(params["w_blend"])
    ptab[ROW_BIAS, COL_BNET:COL_BNET + HIDDEN] = np.asarray(params["b_net"])[0]
    ptab[ROW_BIAS, COL_BACT:COL_BACT + N_RAW_ACTIONS] = np.asarray(params["b_act"])[0]
    ptab[ROW_BIAS, COL_BCOMB:COL_BCOMB + N_PREDS] = np.asarray(params["b_logic"])[0]
    ptab[ROW_BIAS, COL_BCOMB + N_PREDS] = DUMMY_BIAS
    ptab[ROW_BIAS, COL_BCOMB + P1:COL_BCOMB + P1 + 2] = np.asarray(params["b_blend"])[0]
    # additive softor log-mask; 2 extra all-NEG_BIG rows pad actions to N_RAW_ACTIONS
    ptab[ROW_MASK:ROW_MASK + N_RAW_ACTIONS, 0:P1] = NEG_BIG
    for a, idxs in ACTION_TO_PRED.items():
        for j in idxs:
            ptab[ROW_MASK + a, j] = 0.0
    return jnp.asarray(ptab), jnp.asarray(params["w_net"], jnp.float32)


@jax.jit
def blender_actor_forward(neural_state, logic_state, w_net, ptab):
    b = neural_state.shape[0]
    bp = max(8, ((b + 7) // 8) * 8)                     # pad batch to full sublanes
    ns = jnp.pad(neural_state.reshape(b, -1).astype(jnp.float32), ((0, bp - b), (0, 0)))
    ls = jnp.pad(logic_state.astype(jnp.float32), ((0, bp - b), (0, 0)))
    vmem = pl.BlockSpec(memory_space=pltpu.MemorySpace.VMEM)
    out = pl.pallas_call(
        _blender_actor_kernel,
        out_shape=jax.ShapeDtypeStruct((bp, OUT_LANES), jnp.float32),
        in_specs=[vmem, vmem, vmem, vmem],
        out_specs=vmem,
    )(ns, ls, w_net, ptab)
    probs = out[:b, :N_RAW_ACTIONS]
    weights = out[:b, N_RAW_ACTIONS:N_RAW_ACTIONS + 2]
    return probs, weights


# ------------------------- pure-JAX reference check --------------------------
def _reference(neural_state, logic_state, params):
    def softmax(x):
        return jax.nn.softmax(x, axis=-1)

    def torch_logit(p):
        p = jnp.clip(p, LOGIT_EPS, 1.0 - LOGIT_EPS)
        return jnp.log(p) - jnp.log(1.0 - p)

    ns = neural_state.reshape(neural_state.shape[0], -1)
    hid = jnp.maximum(ns @ params["w_net"] + params["b_net"], 0.0)
    neural_probs = softmax(hid @ params["w_act"] + params["b_act"])

    raw = jax.nn.sigmoid(logic_state @ params["w_logic"] + params["b_logic"])
    raw = jnp.concatenate([raw, jnp.zeros((raw.shape[0], 1))], axis=-1)
    rlog = torch_logit(raw)
    vals = []
    for i in range(N_ENV_ACTIONS):
        idx = jnp.array(ACTION_TO_PRED[i])
        vals.append(GAMMA * jax.scipy.special.logsumexp(rlog[:, idx] / GAMMA, axis=-1))
    logic_dist = softmax(jnp.stack(vals, axis=-1))
    logic_probs = jnp.concatenate(
        [logic_dist, jnp.zeros((logic_dist.shape[0], N_RAW_ACTIONS - N_ENV_ACTIONS))], axis=-1)

    pol = softmax(logic_state @ params["w_blend"] + params["b_blend"])
    w = softmax(torch_logit(pol))
    return w[:, 0:1] * neural_probs + w[:, 1:2] * logic_probs, w


# --------------------------------- main ---------------------------------------
def _init_params(key):
    ks = jax.random.split(key, 8)
    return {
        "w_net":   0.05 * jax.random.normal(ks[0], (NEURAL_FLAT, HIDDEN), jnp.float32),
        "b_net":   0.01 * jax.random.normal(ks[1], (1, HIDDEN), jnp.float32),
        "w_act":   0.10 * jax.random.normal(ks[2], (HIDDEN, N_RAW_ACTIONS), jnp.float32),
        "b_act":   0.01 * jax.random.normal(ks[3], (1, N_RAW_ACTIONS), jnp.float32),
        "w_logic": 0.30 * jax.random.normal(ks[4], (L, N_PREDS), jnp.float32),
        "b_logic": 0.01 * jax.random.normal(ks[5], (1, N_PREDS), jnp.float32),
        "w_blend": 0.30 * jax.random.normal(ks[6], (L, 2), jnp.float32),
        "b_blend": 0.01 * jax.random.normal(ks[7], (1, 2), jnp.float32),
    }


if __name__ == "__main__":
    key = jax.random.PRNGKey(0)
    k_ns, k_ls, k_p = jax.random.split(key, 3)
    neural_state = jax.random.normal(k_ns, (B, C, H, W), jnp.float32)   # NCHW
    logic_state = jax.random.uniform(k_ls, (B, L), jnp.float32)
    params = _init_params(k_p)
    ptab, w_net = pack_params(params)

    action_probs, weights = blender_actor_forward(neural_state, logic_state, w_net, ptab)
    jax.block_until_ready((action_probs, weights))

    ref_probs, ref_w = _reference(neural_state.astype(jnp.float32), logic_state, params)
    assert action_probs.shape == (B, N_RAW_ACTIONS) and weights.shape == (B, 2)
    # Kernel uses exact algebraic simplifications (clip-form logit, normalized-
    # odds blend); only float rounding differs from the faithful reference chain.
    assert jnp.allclose(action_probs, ref_probs, atol=2e-5, rtol=2e-5)
    assert jnp.allclose(weights, ref_w, atol=2e-5, rtol=2e-5)

    print("KERNEL_OK")
</pallas_src>

<mosaic_0001>
module attributes {stable_mosaic.version = 11 : i64} {
  func.func @_blender_actor_kernel(%arg0: memref<8x1024xf32, #tpu.memory_space<vmem>>, %arg1: memref<8x32xf32, #tpu.memory_space<vmem>>, %arg2: memref<1024x32xf32, #tpu.memory_space<vmem>>, %arg3: memref<48x128xf32, #tpu.memory_space<vmem>>, %arg4: memref<8x128xf32, #tpu.memory_space<vmem>>) attributes {dimension_semantics = [], scalar_prefetch = 0 : i64, scratch_operands = 0 : i64, tpu.core_type = #tpu.core_type<tc>} {
    %c0 = arith.constant 0 : index
    %c0_0 = arith.constant 0 : index
    %0 = vector.load %arg3[%c0, %c0_0] : memref<48x128xf32, #tpu.memory_space<vmem>>, vector<32x128xf32>
    %c32 = arith.constant 32 : index
    %c0_1 = arith.constant 0 : index
    %1 = vector.load %arg3[%c32, %c0_1] : memref<48x128xf32, #tpu.memory_space<vmem>>, vector<1x128xf32>
    %c40 = arith.constant 40 : index
    %c0_2 = arith.constant 0 : index
    %2 = vector.load %arg3[%c40, %c0_2] : memref<48x128xf32, #tpu.memory_space<vmem>>, vector<8x128xf32>
    %3 = vector.extract_strided_slice %0 {offsets = [0, 0], sizes = [32, 8], strides = [1, 1]} : vector<32x128xf32> to vector<32x8xf32>
    %4 = vector.extract_strided_slice %0 {offsets = [0, 8], sizes = [32, 9], strides = [1, 1]} : vector<32x128xf32> to vector<32x9xf32>
    %5 = vector.extract_strided_slice %1 {offsets = [0, 0], sizes = [1, 32], strides = [1, 1]} : vector<1x128xf32> to vector<1x32xf32>
    %6 = vector.extract_strided_slice %1 {offsets = [0, 32], sizes = [1, 8], strides = [1, 1]} : vector<1x128xf32> to vector<1x8xf32>
    %7 = vector.extract_strided_slice %1 {offsets = [0, 40], sizes = [1, 9], strides = [1, 1]} : vector<1x128xf32> to vector<1x9xf32>
    %8 = vector.extract_strided_slice %2 {offsets = [0, 0], sizes = [8, 7], strides = [1, 1]} : vector<8x128xf32> to vector<8x7xf32>
    %c0_3 = arith.constant 0 : index
    %c0_4 = arith.constant 0 : index
    %9 = vector.load %arg0[%c0_3, %c0_4] : memref<8x1024xf32, #tpu.memory_space<vmem>>, vector<8x1024xf32>
    %c0_5 = arith.constant 0 : index
    %c0_6 = arith.constant 0 : index
    %10 = vector.load %arg2[%c0_5, %c0_6] : memref<1024x32xf32, #tpu.memory_space<vmem>>, vector<1024x32xf32>
    %cst = arith.constant dense<0.000000e+00> : vector<8x32xf32>
    %11 = tpu.matmul %9, %10, %cst {dimension_numbers = #tpu.dot_dimension_numbers<[1], [0], [0], [1], [0, 0, 1, 1], [], []>} : vector<8x1024xf32>, vector<1024x32xf32>, vector<8x32xf32> -> vector<8x32xf32>
    %12 = vector.broadcast %5 : vector<1x32xf32> to vector<8x32xf32>
    %13 = arith.addf %11, %12 : vector<8x32xf32>
    %cst_7 = arith.constant 0.000000e+00 : f32
    %14 = vector.broadcast %cst_7 : f32 to vector<8x32xf32>
    %15 = arith.maximumf %13, %14 : vector<8x32xf32>
    %cst_8 = arith.constant dense<0.000000e+00> : vector<8x8xf32>
    %16 = tpu.matmul %15, %3, %cst_8 {dimension_numbers = #tpu.dot_dimension_numbers<[1], [0], [0], [1], [0, 0, 1, 1], [], []>} : vector<8x32xf32>, vector<32x8xf32>, vector<8x8xf32> -> vector<8x8xf32>
    %17 = vector.broadcast %6 : vector<1x8xf32> to vector<8x8xf32>
    %18 = arith.addf %16, %17 : vector<8x8xf32>
    %cst_9 = arith.constant dense<0xFF800000> : vector<8xf32>
    %19 = vector.multi_reduction <maximumf>, %18, %cst_9 [1] : vector<8x8xf32> to vector<8xf32>
    %20 = vector.shape_cast %19 : vector<8xf32> to vector<8x1xf32>
    %21 = vector.broadcast %20 : vector<8x1xf32> to vector<8x8xf32>
    %22 = arith.subf %18, %21 : vector<8x8xf32>
    %23 = math.exp %22 : vector<8x8xf32>
    %cst_10 = arith.constant dense<0.000000e+00> : vector<8xf32>
    %24 = vector.multi_reduction <add>, %23, %cst_10 [1] : vector<8x8xf32> to vector<8xf32>
    %25 = vector.shape_cast %24 : vector<8xf32> to vector<8x1xf32>
    %26 = vector.broadcast %25 : vector<8x1xf32> to vector<8x8xf32>
    %27 = arith.divf %23, %26 : vector<8x8xf32>
    %c0_11 = arith.constant 0 : index
    %c0_12 = arith.constant 0 : index
    %28 = vector.load %arg1[%c0_11, %c0_12] : memref<8x32xf32, #tpu.memory_space<vmem>>, vector<8x32xf32>
    %cst_13 = arith.constant dense<0.000000e+00> : vector<8x9xf32>
    %29 = tpu.matmul %28, %4, %cst_13 {dimension_numbers = #tpu.dot_dimension_numbers<[1], [0], [0], [1], [0, 0, 1, 1], [], []>} : vector<8x32xf32>, vector<32x9xf32>, vector<8x9xf32> -> vector<8x9xf32>
    %30 = vector.broadcast %7 : vector<1x9xf32> to vector<8x9xf32>
    %31 = arith.addf %29, %30 : vector<8x9xf32>
    %32 = vector.extract_strided_slice %31 {offsets = [0, 0], sizes = [8, 7], strides = [1, 1]} : vector<8x9xf32> to vector<8x7xf32>
    %cst_14 = arith.constant -4.595120e+00 : f32
    %cst_15 = arith.constant 4.595120e+00 : f32
    %33 = vector.broadcast %cst_14 : f32 to vector<8x7xf32>
    %34 = arith.maximumf %33, %32 : vector<8x7xf32>
    %35 = vector.broadcast %cst_15 : f32 to vector<8x7xf32>
    %36 = arith.minimumf %35, %34 : vector<8x7xf32>
    %cst_16 = arith.constant 1.000000e+02 : f32
    %37 = vector.broadcast %cst_16 : f32 to vector<8x7xf32>
    %38 = arith.mulf %36, %37 : vector<8x7xf32>
    %39 = vector.shape_cast %38 : vector<8x7xf32> to vector<8x1x7xf32>
    %40 = vector.shape_cast %8 : vector<8x7xf32> to vector<1x8x7xf32>
    %41 = vector.broadcast %39 : vector<8x1x7xf32> to vector<8x8x7xf32>
    %42 = vector.broadcast %40 : vector<1x8x7xf32> to vector<8x8x7xf32>
    %43 = arith.addf %41, %42 : vector<8x8x7xf32>
    %cst_17 = arith.constant dense<0xFF800000> : vector<8x8xf32>
    %44 = vector.multi_reduction <maximumf>, %43, %cst_17 [2] : vector<8x8x7xf32> to vector<8x8xf32>
    %45 = vector.shape_cast %44 : vector<8x8xf32> to vector<8x8x1xf32>
    %46 = vector.shape_cast %45 : vector<8x8x1xf32> to vector<8x8xf32>
    %47 = vector.broadcast %45 : vector<8x8x1xf32> to vector<8x8x7xf32>
    %48 = arith.subf %43, %47 : vector<8x8x7xf32>
    %49 = math.exp %48 : vector<8x8x7xf32>
    %cst_18 = arith.constant dense<0.000000e+00> : vector<8x8xf32>
    %50 = vector.multi_reduction <add>, %49, %cst_18 [2] : vector<8x8x7xf32> to vector<8x8xf32>
    %51 = math.log %50 : vector<8x8xf32>
    %52 = arith.addf %46, %51 : vector<8x8xf32>
    %cst_19 = arith.constant 0.00999999977 : f32
    %53 = vector.broadcast %cst_19 : f32 to vector<8x8xf32>
    %54 = arith.mulf %53, %52 : vector<8x8xf32>
    %cst_20 = arith.constant dense<0xFF800000> : vector<8xf32>
    %55 = vector.multi_reduction <maximumf>, %54, %cst_20 [1] : vector<8x8xf32> to vector<8xf32>
    %56 = vector.shape_cast %55 : vector<8xf32> to vector<8x1xf32>
    %57 = vector.broadcast %56 : vector<8x1xf32> to vector<8x8xf32>
    %58 = arith.subf %54, %57 : vector<8x8xf32>
    %59 = math.exp %58 : vector<8x8xf32>
    %cst_21 = arith.constant dense<0.000000e+00> : vector<8xf32>
    %60 = vector.multi_reduction <add>, %59, %cst_21 [1] : vector<8x8xf32> to vector<8xf32>
    %61 = vector.shape_cast %60 : vector<8xf32> to vector<8x1xf32>
    %62 = vector.broadcast %61 : vector<8x1xf32> to vector<8x8xf32>
    %63 = arith.divf %59, %62 : vector<8x8xf32>
    %64 = vector.extract_strided_slice %31 {offsets = [0, 7], sizes = [8, 2], strides = [1, 1]} : vector<8x9xf32> to vector<8x2xf32>
    %cst_22 = arith.constant dense<0xFF800000> : vector<8xf32>
    %65 = vector.multi_reduction <maximumf>, %64, %cst_22 [1] : vector<8x2xf32> to vector<8xf32>
    %66 = vector.shape_cast %65 : vector<8xf32> to vector<8x1xf32>
    %67 = vector.broadcast %66 : vector<8x1xf32> to vector<8x2xf32>
    %68 = arith.subf %64, %67 : vector<8x2xf32>
    %69 = math.exp %68 : vector<8x2xf32>
    %cst_23 = arith.constant dense<0.000000e+00> : vector<8xf32>
    %70 = vector.multi_reduction <add>, %69, %cst_23 [1] : vector<8x2xf32> to vector<8xf32>
    %71 = vector.shape_cast %70 : vector<8xf32> to vector<8x1xf32>
    %72 = vector.broadcast %71 : vector<8x1xf32> to vector<8x2xf32>
    %73 = arith.divf %69, %72 : vector<8x2xf32>
    %cst_24 = arith.constant 0.00999999977 : f32
    %cst_25 = arith.constant 9.900000e-01 : f32
    %74 = vector.broadcast %cst_24 : f32 to vector<8x2xf32>
    %75 = arith.maximumf %74, %73 : vector<8x2xf32>
    %76 = vector.broadcast %cst_25 : f32 to vector<8x2xf32>
    %77 = arith.minimumf %76, %75 : vector<8x2xf32>
    %cst_26 = arith.constant 1.000000e+00 : f32
    %78 = vector.broadcast %cst_26 : f32 to vector<8x2xf32>
    %79 = arith.subf %78, %77 : vector<8x2xf32>
    %80 = arith.divf %77, %79 : vector<8x2xf32>
    %cst_27 = arith.constant dense<0.000000e+00> : vector<8xf32>
    %81 = vector.multi_reduction <add>, %80, %cst_27 [1] : vector<8x2xf32> to vector<8xf32>
    %82 = vector.shape_cast %81 : vector<8xf32> to vector<8x1xf32>
    %83 = vector.broadcast %82 : vector<8x1xf32> to vector<8x2xf32>
    %84 = arith.divf %80, %83 : vector<8x2xf32>
    %85 = vector.extract_strided_slice %84 {offsets = [0, 0], sizes = [8, 1], strides = [1, 1]} : vector<8x2xf32> to vector<8x1xf32>
    %86 = vector.broadcast %85 : vector<8x1xf32> to vector<8x8xf32>
    %87 = arith.mulf %86, %27 : vector<8x8xf32>
    %88 = vector.extract_strided_slice %84 {offsets = [0, 1], sizes = [8, 1], strides = [1, 1]} : vector<8x2xf32> to vector<8x1xf32>
    %89 = vector.broadcast %88 : vector<8x1xf32> to vector<8x8xf32>
    %90 = arith.mulf %89, %63 : vector<8x8xf32>
    %91 = arith.addf %87, %90 : vector<8x8xf32>
    %cst_28 = arith.constant 0.000000e+00 : f32
    %92 = vector.broadcast %cst_28 : f32 to vector<8x118xf32>
    %93 = tpu.concatenate %91, %84, %92 in 1 : vector<8x8xf32>, vector<8x2xf32>, vector<8x118xf32> -> vector<8x128xf32>
    %c0_29 = arith.constant 0 : index
    %c0_30 = arith.constant 0 : index
    %94 = vector.load %arg4[%c0_29, %c0_30] : memref<8x128xf32, #tpu.memory_space<vmem>>, vector<8x128xf32>
    tpu.vector_store %arg4[%c0_29, %c0_30], %93 {strides = array<i32>} : memref<8x128xf32, #tpu.memory_space<vmem>>, vector<8x128xf32>,
    return
  }
}

</mosaic_0001>

<llo_original>
// kernel: blender_actor_forward.1
$region0: #{blender_actor_forward.1}
  #allocation0 [shape = 'u32[]', space=smem, size = 0x4, offset = 0x4, fixed_abs, tag = 'smem constant byte address 0x4 - core index']
  #allocation1 [shape = 'u32[72,128]{1,0:T(1,128)}', space=vmem, size = 0x9000, scoped, tag = 'internal scratch']
  %s0 = inlined_call_operand.vmem [shape: f32[8,1024], index: 0, kind: input, shape index: {}]
  %s1 = inlined_call_operand.vmem [shape: f32[8,32], index: 1, kind: input, shape index: {}]
  %s2 = inlined_call_operand.vmem [shape: f32[1024,32], index: 2, kind: input, shape index: {}]
  %s3 = inlined_call_operand.vmem [shape: f32[48,128], index: 3, kind: input, shape index: {}]
  %s4 = inlined_call_operand.vmem [shape: f32[8,128], index: 4, kind: output, shape index: {}]
  %s5 = sld [smem:[#allocation0]]
  $region26: #{blender_actor_forward.1} parent=0
    _
  %s7 = ssub.s32 1, %s5
  %s8 = scalar_select 0, %s7, %s5
  // Predicated region
  $region2: #{blender_actor_forward.1} parent=0 // pred_check
    _
  $region3: #{blender_actor_forward.1} parent=0 // pred_check_branch
    %10 = sbr.rel (0) target = $region5
  $region4: #{blender_actor_forward.1} parent=0 // pred_region
    _
  $region5: #{blender_actor_forward.1} parent=0 // pred_fallthru
    _
  // Predicated region
  $region6: #{blender_actor_forward.1} parent=0 // pred_check
    _
  $region7: #{blender_actor_forward.1} parent=0 // pred_check_branch
    %12 = sbr.rel (0) target = $region9
  $region8: #{blender_actor_forward.1} parent=0 // pred_region
    _
  $region9: #{blender_actor_forward.1} parent=0 // pred_fallthru
    _
  // Predicated region
  $region10: #{blender_actor_forward.1} parent=0 // pred_check
    _
  $region11: #{blender_actor_forward.1} parent=0 // pred_check_branch
    %14 = sbr.rel (0) target = $region13
  $region12: #{blender_actor_forward.1} parent=0 // pred_region
    _
  $region13: #{blender_actor_forward.1} parent=0 // pred_fallthru
    _
  // Predicated region
  $region14: #{blender_actor_forward.1} parent=0 // pred_check
    _
  $region15: #{blender_actor_forward.1} parent=0 // pred_check_branch
    %16 = sbr.rel (0) target = $region17
  $region16: #{blender_actor_forward.1} parent=0 // pred_region
    _
  $region17: #{blender_actor_forward.1} parent=0 // pred_fallthru
    _
  %v17 = vld [vmem:[%s3] sm:$0xff]
  %v18 = vld [vmem:[%s3 + $0x8] sm:$0xff]
  %v19 = vld [vmem:[%s3 + $0x10] sm:$0xff]
  %v20 = vld [vmem:[%s3 + $0x18] sm:$0xff]
  %v21 = vld [vmem:[%s3 + $0x20] sm:$0x1]
  %v22 = vld [vmem:[%s3 + $0x28] sm:$0xff]
  %v23 = vld [vmem:[%s0] sm:$0xff]
  %v24 = vld [vmem:[%s0 + $0x8] sm:$0xff]
  %v25 = vld [vmem:[%s0 + $0x10] sm:$0xff]
  %v26 = vld [vmem:[%s0 + $0x18] sm:$0xff]
  %v27 = vld [vmem:[%s0 + $0x20] sm:$0xff]
  %v28 = vld [vmem:[%s0 + $0x28] sm:$0xff]
  %v29 = vld [vmem:[%s0 + $0x30] sm:$0xff]
  %v30 = vld [vmem:[%s0 + $0x38] sm:$0xff]
  %v31 = vld [vmem:[%s2] sm:$0xff]
  %v32 = vld [vmem:[%s2 + $0x8] sm:$0xff]
  %v33 = vld [vmem:[%s2 + $0x10] sm:$0xff]
  %v34 = vld [vmem:[%s2 + $0x18] sm:$0xff]
  %v35 = vld [vmem:[%s2 + $0x20] sm:$0xff]
  %v36 = vld [vmem:[%s2 + $0x28] sm:$0xff]
  %v37 = vld [vmem:[%s2 + $0x30] sm:$0xff]
  %v38 = vld [vmem:[%s2 + $0x38] sm:$0xff]
  %v39 = vld [vmem:[%s2 + $0x40] sm:$0xff]
  %v40 = vld [vmem:[%s2 + $0x48] sm:$0xff]
  %v41 = vld [vmem:[%s2 + $0x50] sm:$0xff]
  %v42 = vld [vmem:[%s2 + $0x58] sm:$0xff]
  %v43 = vld [vmem:[%s2 + $0x60] sm:$0xff]
  %v44 = vld [vmem:[%s2 + $0x68] sm:$0xff]
  %v45 = vld [vmem:[%s2 + $0x70] sm:$0xff]
  %v46 = vld [vmem:[%s2 + $0x78] sm:$0xff]
  %v47 = vld [vmem:[%s2 + $0x80] sm:$0xff]
  %v48 = vld [vmem:[%s2 + $0x88] sm:$0xff]
  %v49 = vld [vmem:[%s2 + $0x90] sm:$0xff]
  %v50 = vld [vmem:[%s2 + $0x98] sm:$0xff]
  %v51 = vld [vmem:[%s2 + $0xa0] sm:$0xff]
  %v52 = vld [vmem:[%s2 + $0xa8] sm:$0xff]
  %v53 = vld [vmem:[%s2 + $0xb0] sm:$0xff]
  %v54 = vld [vmem:[%s2 + $0xb8] sm:$0xff]
  %v55 = vld [vmem:[%s2 + $0xc0] sm:$0xff]
  %v56 = vld [vmem:[%s2 + $0xc8] sm:$0xff]
  %v57 = vld [vmem:[%s2 + $0xd0] sm:$0xff]
  %v58 = vld [vmem:[%s2 + $0xd8] sm:$0xff]
  %v59 = vld [vmem:[%s2 + $0xe0] sm:$0xff]
  %v60 = vld [vmem:[%s2 + $0xe8] sm:$0xff]
  %v61 = vld [vmem:[%s2 + $0xf0] sm:$0xff]
  %v62 = vld [vmem:[%s2 + $0xf8] sm:$0xff]
  %v63 = vld [vmem:[%s2 + $0x100] sm:$0xff]
  %v64 = vld [vmem:[%s2 + $0x108] sm:$0xff]
  %v65 = vld [vmem:[%s2 + $0x110] sm:$0xff]
  %v66 = vld [vmem:[%s2 + $0x118] sm:$0xff]
  %v67 = vld [vmem:[%s2 + $0x120] sm:$0xff]
  %v68 = vld [vmem:[%s2 + $0x128] sm:$0xff]
  %v69 = vld [vmem:[%s2 + $0x130] sm:$0xff]
  %v70 = vld [vmem:[%s2 + $0x138] sm:$0xff]
  %v71 = vld [vmem:[%s2 + $0x140] sm:$0xff]
  %v72 = vld [vmem:[%s2 + $0x148] sm:$0xff]
  %v73 = vld [vmem:[%s2 + $0x150] sm:$0xff]
  %v74 = vld [vmem:[%s2 + $0x158] sm:$0xff]
  %v75 = vld [vmem:[%s2 + $0x160] sm:$0xff]
  %v76 = vld [vmem:[%s2 + $0x168] sm:$0xff]
  %v77 = vld [vmem:[%s2 + $0x170] sm:$0xff]
  %v78 = vld [vmem:[%s2 + $0x178] sm:$0xff]
  %v79 = vld [vmem:[%s2 + $0x180] sm:$0xff]
  %v80 = vld [vmem:[%s2 + $0x188] sm:$0xff]
  %v81 = vld [vmem:[%s2 + $0x190] sm:$0xff]
  %v82 = vld [vmem:[%s2 + $0x198] sm:$0xff]
  %v83 = vld [vmem:[%s2 + $0x1a0] sm:$0xff]
  %v84 = vld [vmem:[%s2 + $0x1a8] sm:$0xff]
  %v85 = vld [vmem:[%s2 + $0x1b0] sm:$0xff]
  %v86 = vld [vmem:[%s2 + $0x1b8] sm:$0xff]
  %v87 = vld [vmem:[%s2 + $0x1c0] sm:$0xff]
  %v88 = vld [vmem:[%s2 + $0x1c8] sm:$0xff]
  %v89 = vld [vmem:[%s2 + $0x1d0] sm:$0xff]
  %v90 = vld [vmem:[%s2 + $0x1d8] sm:$0xff]
  %v91 = vld [vmem:[%s2 + $0x1e0] sm:$0xff]
  %v92 = vld [vmem:[%s2 + $0x1e8] sm:$0xff]
  %v93 = vld [vmem:[%s2 + $0x1f0] sm:$0xff]
  %v94 = vld [vmem:[%s2 + $0x1f8] sm:$0xff]
  %v95 = vld [vmem:[%s2 + $0x200] sm:$0xff]
  %v96 = vld [vmem:[%s2 + $0x208] sm:$0xff]
  %v97 = vld [vmem:[%s2 + $0x210] sm:$0xff]
  %v98 = vld [vmem:[%s2 + $0x218] sm:$0xff]
  %v99 = vld [vmem:[%s2 + $0x220] sm:$0xff]
  %v100 = vld [vmem:[%s2 + $0x228] sm:$0xff]
  %v101 = vld [vmem:[%s2 + $0x230] sm:$0xff]
  %v102 = vld [vmem:[%s2 + $0x238] sm:$0xff]
  %v103 = vld [vmem:[%s2 + $0x240] sm:$0xff]
  %v104 = vld [vmem:[%s2 + $0x248] sm:$0xff]
  %v105 = vld [vmem:[%s2 + $0x250] sm:$0xff]
  %v106 = vld [vmem:[%s2 + $0x258] sm:$0xff]
  %v107 = vld [vmem:[%s2 + $0x260] sm:$0xff]
  %v108 = vld [vmem:[%s2 + $0x268] sm:$0xff]
  %v109 = vld [vmem:[%s2 + $0x270] sm:$0xff]
  %v110 = vld [vmem:[%s2 + $0x278] sm:$0xff]
  %v111 = vld [vmem:[%s2 + $0x280] sm:$0xff]
  %v112 = vld [vmem:[%s2 + $0x288] sm:$0xff]
  %v113 = vld [vmem:[%s2 + $0x290] sm:$0xff]
  %v114 = vld [vmem:[%s2 + $0x298] sm:$0xff]
  %v115 = vld [vmem:[%s2 + $0x2a0] sm:$0xff]
  %v116 = vld [vmem:[%s2 + $0x2a8] sm:$0xff]
  %v117 = vld [vmem:[%s2 + $0x2b0] sm:$0xff]
  %v118 = vld [vmem:[%s2 + $0x2b8] sm:$0xff]
  %v119 = vld [vmem:[%s2 + $0x2c0] sm:$0xff]
  %v120 = vld [vmem:[%s2 + $0x2c8] sm:$0xff]
  %v121 = vld [vmem:[%s2 + $0x2d0] sm:$0xff]
  %v122 = vld [vmem:[%s2 + $0x2d8] sm:$0xff]
  %v123 = vld [vmem:[%s2 + $0x2e0] sm:$0xff]
  %v124 = vld [vmem:[%s2 + $0x2e8] sm:$0xff]
  %v125 = vld [vmem:[%s2 + $0x2f0] sm:$0xff]
  %v126 = vld [vmem:[%s2 + $0x2f8] sm:$0xff]
  %v127 = vld [vmem:[%s2 + $0x300] sm:$0xff]
  %v128 = vld [vmem:[%s2 + $0x308] sm:$0xff]
  %v129 = vld [vmem:[%s2 + $0x310] sm:$0xff]
  %v130 = vld [vmem:[%s2 + $0x318] sm:$0xff]
  %v131 = vld [vmem:[%s2 + $0x320] sm:$0xff]
  %v132 = vld [vmem:[%s2 + $0x328] sm:$0xff]
  %v133 = vld [vmem:[%s2 + $0x330] sm:$0xff]
  %v134 = vld [vmem:[%s2 + $0x338] sm:$0xff]
  %v135 = vld [vmem:[%s2 + $0x340] sm:$0xff]
  %v136 = vld [vmem:[%s2 + $0x348] sm:$0xff]
  %v137 = vld [vmem:[%s2 + $0x350] sm:$0xff]
  %v138 = vld [vmem:[%s2 + $0x358] sm:$0xff]
  %v139 = vld [vmem:[%s2 + $0x360] sm:$0xff]
  %v140 = vld [vmem:[%s2 + $0x368] sm:$0xff]
  %v141 = vld [vmem:[%s2 + $0x370] sm:$0xff]
  %v142 = vld [vmem:[%s2 + $0x378] sm:$0xff]
  %v143 = vld [vmem:[%s2 + $0x380] sm:$0xff]
  %v144 = vld [vmem:[%s2 + $0x388] sm:$0xff]
  %v145 = vld [vmem:[%s2 + $0x390] sm:$0xff]
  %v146 = vld [vmem:[%s2 + $0x398] sm:$0xff]
  %v147 = vld [vmem:[%s2 + $0x3a0] sm:$0xff]
  %v148 = vld [vmem:[%s2 + $0x3a8] sm:$0xff]
  %v149 = vld [vmem:[%s2 + $0x3b0] sm:$0xff]
  %v150 = vld [vmem:[%s2 + $0x3b8] sm:$0xff]
  %v151 = vld [vmem:[%s2 + $0x3c0] sm:$0xff]
  %v152 = vld [vmem:[%s2 + $0x3c8] sm:$0xff]
  %v153 = vld [vmem:[%s2 + $0x3d0] sm:$0xff]
  %v154 = vld [vmem:[%s2 + $0x3d8] sm:$0xff]
  %v155 = vld [vmem:[%s2 + $0x3e0] sm:$0xff]
  %v156 = vld [vmem:[%s2 + $0x3e8] sm:$0xff]
  %v157 = vld [vmem:[%s2 + $0x3f0] sm:$0xff]
  %v158 = vld [vmem:[%s2 + $0x3f8] sm:$0xff]
  %v159 = vperm.slane %v21, 0
  %160 = vmatpush.msra.mxu0 %v46
  %161 = vmatpush.msra.mxu0 %v45
  %162 = vmatpush.msra.mxu0 %v44
  %163 = vmatpush.msra.mxu0 %v43
  %164 = vmatpush.msra.mxu0 %v42
  %165 = vmatpush.msra.mxu0 %v41
  %166 = vmatpush.msra.mxu0 %v40
  %167 = vmatpush.msra.mxu0 %v39
  %168 = vmatpush.msra.mxu0 %v38
  %169 = vmatpush.msra.mxu0 %v37
  %170 = vmatpush.msra.mxu0 %v36
  %171 = vmatpush.msra.mxu0 %v35
  %172 = vmatpush.msra.mxu0 %v34
  %173 = vmatpush.msra.mxu0 %v33
  %174 = vmatpush.msra.mxu0 %v32
  %175 = vmatpush.msra.mxu0 %v31
  %176 = vmatmul.f32.gmra.mxu0 %v23
  %v177 = vpop.f32.mrf.mxu0
  %v178 = vadd.f32 %v159, %v177
  %179 = vdwg.mxu0
  %180 = vmatpush.msra.mxu0 %v62
  %181 = vmatpush.msra.mxu0 %v61
  %182 = vmatpush.msra.mxu0 %v60
  %183 = vmatpush.msra.mxu0 %v59
  %184 = vmatpush.msra.mxu0 %v58
  %185 = vmatpush.msra.mxu0 %v57
  %186 = vmatpush.msra.mxu0 %v56
  %187 = vmatpush.msra.mxu0 %v55
  %188 = vmatpush.msra.mxu0 %v54
  %189 = vmatpush.msra.mxu0 %v53
  %190 = vmatpush.msra.mxu0 %v52
  %191 = vmatpush.msra.mxu0 %v51
  %192 = vmatpush.msra.mxu0 %v50
  %193 = vmatpush.msra.mxu0 %v49
  %194 = vmatpush.msra.mxu0 %v48
  %195 = vmatpush.msra.mxu0 %v47
  %196 = vmatmul.f32.gmra.mxu0 %v24
  %v197 = vpop.f32.mrf.mxu0
  %v198 = vadd.f32 %v178, %v197
  %199 = vdwg.mxu0
  %200 = vmatpush.msra.mxu0 %v78
  %201 = vmatpush.msra.mxu0 %v77
  %202 = vmatpush.msra.mxu0 %v76
  %203 = vmatpush.msra.mxu0 %v75
  %204 = vmatpush.msra.mxu0 %v74
  %205 = vmatpush.msra.mxu0 %v73
  %206 = vmatpush.msra.mxu0 %v72
  %207 = vmatpush.msra.mxu0 %v71
  %208 = vmatpush.msra.mxu0 %v70
  %209 = vmatpush.msra.mxu0 %v69
  %210 = vmatpush.msra.mxu0 %v68
  %211 = vmatpush.msra.mxu0 %v67
  %212 = vmatpush.msra.mxu0 %v66
  %213 = vmatpush.msra.mxu0 %v65
  %214 = vmatpush.msra.mxu0 %v64
  %215 = vmatpush.msra.mxu0 %v63
  %216 = vmatmul.f32.gmra.mxu0 %v25
  %v217 = vpop.f32.mrf.mxu0
  %v218 = vadd.f32 %v198, %v217
  %219 = vdwg.mxu0
  %220 = vmatpush.msra.mxu0 %v94
  %221 = vmatpush.msra.mxu0 %v93
  %222 = vmatpush.msra.mxu0 %v92
  %223 = vmatpush.msra.mxu0 %v91
  %224 = vmatpush.msra.mxu0 %v90
  %225 = vmatpush.msra.mxu0 %v89
  %226 = vmatpush.msra.mxu0 %v88
  %227 = vmatpush.msra.mxu0 %v87
  %228 = vmatpush.msra.mxu0 %v86
  %229 = vmatpush.msra.mxu0 %v85
  %230 = vmatpush.msra.mxu0 %v84
  %231 = vmatpush.msra.mxu0 %v83
  %232 = vmatpush.msra.mxu0 %v82
  %233 = vmatpush.msra.mxu0 %v81
  %234 = vmatpush.msra.mxu0 %v80
  %235 = vmatpush.msra.mxu0 %v79
  %236 = vmatmul.f32.gmra.mxu0 %v26
  %v237 = vpop.f32.mrf.mxu0
  %v238 = vadd.f32 %v218, %v237
  %239 = vdwg.mxu0
  %240 = vmatpush.msra.mxu0 %v110
  %241 = vmatpush.msra.mxu0 %v109
  %242 = vmatpush.msra.mxu0 %v108
  %243 = vmatpush.msra.mxu0 %v107
  %244 = vmatpush.msra.mxu0 %v106
  %245 = vmatpush.msra.mxu0 %v105
  %246 = vmatpush.msra.mxu0 %v104
  %247 = vmatpush.msra.mxu0 %v103
  %248 = vmatpush.msra.mxu0 %v102
  %249 = vmatpush.msra.mxu0 %v101
  %250 = vmatpush.msra.mxu0 %v100
  %251 = vmatpush.msra.mxu0 %v99
  %252 = vmatpush.msra.mxu0 %v98
  %253 = vmatpush.msra.mxu0 %v97
  %254 = vmatpush.msra.mxu0 %v96
  %255 = vmatpush.msra.mxu0 %v95
  %256 = vmatmul.f32.gmra.mxu0 %v27
  %v257 = vpop.f32.mrf.mxu0
  %v258 = vadd.f32 %v238, %v257
  %259 = vdwg.mxu0
  %260 = vmatpush.msra.mxu0 %v126
  %261 = vmatpush.msra.mxu0 %v125
  %262 = vmatpush.msra.mxu0 %v124
  %263 = vmatpush.msra.mxu0 %v123
  %264 = vmatpush.msra.mxu0 %v122
  %265 = vmatpush.msra.mxu0 %v121
  %266 = vmatpush.msra.mxu0 %v120
  %267 = vmatpush.msra.mxu0 %v119
  %268 = vmatpush.msra.mxu0 %v118
  %269 = vmatpush.msra.mxu0 %v117
  %270 = vmatpush.msra.mxu0 %v116
  %271 = vmatpush.msra.mxu0 %v115
  %272 = vmatpush.msra.mxu0 %v114
  %273 = vmatpush.msra.mxu0 %v113
  %274 = vmatpush.msra.mxu0 %v112
  %275 = vmatpush.msra.mxu0 %v111
  %276 = vmatmul.f32.gmra.mxu0 %v28
  %v277 = vpop.f32.mrf.mxu0
  %v278 = vadd.f32 %v258, %v277
  %279 = vdwg.mxu0
  %280 = vmatpush.msra.mxu0 %v142
  %281 = vmatpush.msra.mxu0 %v141
  %282 = vmatpush.msra.mxu0 %v140
  %283 = vmatpush.msra.mxu0 %v139
  %284 = vmatpush.msra.mxu0 %v138
  %285 = vmatpush.msra.mxu0 %v137
  %286 = vmatpush.msra.mxu0 %v136
  %287 = vmatpush.msra.mxu0 %v135
  %288 = vmatpush.msra.mxu0 %v134
  %289 = vmatpush.msra.mxu0 %v133
  %290 = vmatpush.msra.mxu0 %v132
  %291 = vmatpush.msra.mxu0 %v131
  %292 = vmatpush.msra.mxu0 %v130
  %293 = vmatpush.msra.mxu0 %v129
  %294 = vmatpush.msra.mxu0 %v128
  %295 = vmatpush.msra.mxu0 %v127
  %296 = vmatmul.f32.gmra.mxu0 %v29
  %v297 = vpop.f32.mrf.mxu0
  %v298 = vadd.f32 %v278, %v297
  %299 = vdwg.mxu0
  %300 = vmatpush.msra.mxu0 %v158
  %301 = vmatpush.msra.mxu0 %v157
  %302 = vmatpush.msra.mxu0 %v156
  %303 = vmatpush.msra.mxu0 %v155
  %304 = vmatpush.msra.mxu0 %v154
  %305 = vmatpush.msra.mxu0 %v153
  %306 = vmatpush.msra.mxu0 %v152
  %307 = vmatpush.msra.mxu0 %v151
  %308 = vmatpush.msra.mxu0 %v150
  %309 = vmatpush.msra.mxu0 %v149
  %310 = vmatpush.msra.mxu0 %v148
  %311 = vmatpush.msra.mxu0 %v147
  %312 = vmatpush.msra.mxu0 %v146
  %313 = vmatpush.msra.mxu0 %v145
  %314 = vmatpush.msra.mxu0 %v144
  %315 = vmatpush.msra.mxu0 %v143
  %316 = vmatmul.f32.gmra.mxu0 %v30
  %v317 = vpop.f32.mrf.mxu0
  %v318 = vadd.f32 %v298, %v317
  %319 = vdwg.mxu0
  %v320 = vmax.f32 %v318, 0.0
  %322 = vrot.lane.b32.xlu0 %v159, 96
  %v323 = vpop.permute.xlu0 %322
  %vm325 = vcmask 261120
  %v327 = vsel %vm325, %v320, 0
  %329 = vmatpush.msra.mxu0 0.0
  %330 = vmatpush.msra.mxu0 0.0
  %331 = vmatpush.msra.mxu0 0.0
  %332 = vmatpush.msra.mxu0 0.0
  %333 = vmatpush.msra.mxu0 0.0
  %334 = vmatpush.msra.mxu0 0.0
  %335 = vmatpush.msra.mxu0 0.0
  %336 = vmatpush.msra.mxu0 0.0
  %337 = vmatpush.msra.mxu0 0.0
  %338 = vmatpush.msra.mxu0 0.0
  %339 = vmatpush.msra.mxu0 0.0
  %340 = vmatpush.msra.mxu0 0.0
  %341 = vmatpush.msra.mxu0 %v20
  %342 = vmatpush.msra.mxu0 %v19
  %343 = vmatpush.msra.mxu0 %v18
  %344 = vmatpush.msra.mxu0 %v17
  %345 = vmatmul.f32.gmra.mxu0 %v327
  %v346 = vpop.f32.mrf.mxu0
  %v347 = vadd.f32 %v323, %v346
  %348 = vdwg.mxu0
  %vm349 = vcmask 64512
  %v350 = vsel %vm349, %v347, -inf
  %351 = vmax.xlane.f32.xlu0 %v350
  %v352 = vpop.xlane.xlu0 %351
  %v353 = vsub.f32 %v347, %v352
  %v354 = vmul.f32 %v353, 1.442695
  %v355 = vpow.pop %v354
  %v356 = vsel %vm349, %v355, 0.0
  %357 = vadd.xlane.f32.xlu0 %v356
  %v358 = vpop.xlane.xlu0 %357
  %v359 = vrcp.pop %v358
  %v360 = vmul.f32 %v358, %v359
  %v361 = vsub.f32 1.0, %v360
  %v362 = vmul.f32 %v359, %v361
  %v363 = vadd.f32 %v359, %v362
  %vm364 = vweird.f32 %v358
  %vm365 = vweird.f32 %v359
  %vm366 = vmor %vm364, %vm365
  %v367 = vsel %vm366, %v359, %v363
  %v368 = vand.u32 2147483647, %v358
  %vm369 = vcmp.eq.f32.partialorder %v368, 8.507059e+37
  %v370 = vand.u32 %v358, 2147483648
  %v371 = vor.u32 1.1754944e-38, %v370
  %v372 = vsel %vm369, %v371, %v367
  %v373 = vmul.f32 %v355, %v372
  %v374 = vld [vmem:[%s1] sm:$0xff]
  %379 = vrot.lane.b32.xlu0 %v17, 120
  %v380 = vpop.permute.xlu0 %379
  %381 = vrot.lane.b32.xlu0 %v18, 120
  %v382 = vpop.permute.xlu0 %381
  %383 = vrot.lane.b32.xlu0 %v19, 120
  %v384 = vpop.permute.xlu0 %383
  %385 = vrot.lane.b32.xlu0 %v20, 120
  %v386 = vpop.permute.xlu0 %385
  %391 = vrot.lane.b32.xlu0 %v159, 88
  %v392 = vpop.permute.xlu0 %391
  %v395 = vsel %vm325, %v374, 0
  %397 = vmatpush.msra.mxu0 0.0
  %398 = vmatpush.msra.mxu0 0.0
  %399 = vmatpush.msra.mxu0 0.0
  %400 = vmatpush.msra.mxu0 0.0
  %401 = vmatpush.msra.mxu0 0.0
  %402 = vmatpush.msra.mxu0 0.0
  %403 = vmatpush.msra.mxu0 0.0
  %404 = vmatpush.msra.mxu0 0.0
  %405 = vmatpush.msra.mxu0 0.0
  %406 = vmatpush.msra.mxu0 0.0
  %407 = vmatpush.msra.mxu0 0.0
  %408 = vmatpush.msra.mxu0 0.0
  %409 = vmatpush.msra.mxu0 %v386
  %410 = vmatpush.msra.mxu0 %v384
  %411 = vmatpush.msra.mxu0 %v382
  %412 = vmatpush.msra.mxu0 %v380
  %413 = vmatmul.f32.gmra.mxu0 %v395
  %v414 = vpop.f32.mrf.mxu0
  %v415 = vadd.f32 %v392, %v414
  %416 = vdwg.mxu0
  %v417 = vmax.f32 %v415, -4.59512
  %v418 = vmin.f32 %v417, 4.59512
  %v419 = vmul.f32 %v418, 100.0
  %v421 = vrot.slane %v419, 1
  %v422 = vrot.slane %v419, 2
  %v423 = vrot.slane %v419, 3
  %v424 = vrot.slane %v419, 4
  %v425 = vrot.slane %v419, 5
  %v426 = vrot.slane %v419, 6
  %v427 = vrot.slane %v419, 7
  %v428 = vperm.slane %v419, 0
  %v429 = vperm.slane %v421, 0
  %v430 = vperm.slane %v422, 0
  %v431 = vperm.slane %v423, 0
  %v432 = vperm.slane %v424, 0
  %v433 = vperm.slane %v425, 0
  %v434 = vperm.slane %v426, 0
  %v435 = vperm.slane %v427, 0
  %v444 = vadd.f32 %v428, %v22
  %v445 = vadd.f32 %v429, %v22
  %v446 = vadd.f32 %v430, %v22
  %v447 = vadd.f32 %v431, %v22
  %v448 = vadd.f32 %v432, %v22
  %v449 = vadd.f32 %v433, %v22
  %v450 = vadd.f32 %v434, %v22
  %v451 = vadd.f32 %v435, %v22
  %vm452 = vcmask 56320
  %v453 = vsel %vm452, %v444, -inf
  %454 = vmax.xlane.f32.xlu0 %v453
  %v455 = vpop.xlane.xlu0 %454
  %v456 = vsel %vm452, %v445, -inf
  %457 = vmax.xlane.f32.xlu0 %v456
  %v458 = vpop.xlane.xlu0 %457
  %v459 = vsel %vm452, %v446, -inf
  %460 = vmax.xlane.f32.xlu0 %v459
  %v461 = vpop.xlane.xlu0 %460
  %v462 = vsel %vm452, %v447, -inf
  %463 = vmax.xlane.f32.xlu0 %v462
  %v464 = vpop.xlane.xlu0 %463
  %v465 = vsel %vm452, %v448, -inf
  %466 = vmax.xlane.f32.xlu0 %v465
  %v467 = vpop.xlane.xlu0 %466
  %v468 = vsel %vm452, %v449, -inf
  %469 = vmax.xlane.f32.xlu0 %v468
  %v470 = vpop.xlane.xlu0 %469
  %v471 = vsel %vm452, %v450, -inf
  %472 = vmax.xlane.f32.xlu0 %v471
  %v473 = vpop.xlane.xlu0 %472
  %v474 = vsel %vm452, %v451, -inf
  %475 = vmax.xlane.f32.xlu0 %v474
  %v476 = vpop.xlane.xlu0 %475
  %v477 = vsub.f32 %v444, %v455
  %v478 = vsub.f32 %v445, %v458
  %v479 = vsub.f32 %v446, %v461
  %v480 = vsub.f32 %v447, %v464
  %v481 = vsub.f32 %v448, %v467
  %v482 = vsub.f32 %v449, %v470
  %v483 = vsub.f32 %v450, %v473
  %v484 = vsub.f32 %v451, %v476
  %v485 = vmul.f32 %v477, 1.442695
  %v486 = vpow.pop %v485
  %v487 = vmul.f32 %v478, 1.442695
  %v488 = vpow.pop %v487
  %v489 = vmul.f32 %v479, 1.442695
  %v490 = vpow.pop %v489
  %v491 = vmul.f32 %v480, 1.442695
  %v492 = vpow.pop %v491
  %v493 = vmul.f32 %v481, 1.442695
  %v494 = vpow.pop %v493
  %v495 = vmul.f32 %v482, 1.442695
  %v496 = vpow.pop %v495
  %v497 = vmul.f32 %v483, 1.442695
  %v498 = vpow.pop %v497
  %v499 = vmul.f32 %v484, 1.442695
  %v500 = vpow.pop %v499
  %v501 = vsel %vm452, %v486, 0.0
  %502 = vadd.xlane.f32.xlu0 %v501
  %v503 = vpop.xlane.xlu0 %502
  %v504 = vsel %vm452, %v488, 0.0
  %505 = vadd.xlane.f32.xlu0 %v504
  %v506 = vpop.xlane.xlu0 %505
  %v507 = vsel %vm452, %v490, 0.0
  %508 = vadd.xlane.f32.xlu0 %v507
  %v509 = vpop.xlane.xlu0 %508
  %v510 = vsel %vm452, %v492, 0.0
  %511 = vadd.xlane.f32.xlu0 %v510
  %v512 = vpop.xlane.xlu0 %511
  %v513 = vsel %vm452, %v494, 0.0
  %514 = vadd.xlane.f32.xlu0 %v513
  %v515 = vpop.xlane.xlu0 %514
  %v516 = vsel %vm452, %v496, 0.0
  %517 = vadd.xlane.f32.xlu0 %v516
  %v518 = vpop.xlane.xlu0 %517
  %v519 = vsel %vm452, %v498, 0.0
  %520 = vadd.xlane.f32.xlu0 %v519
  %v521 = vpop.xlane.xlu0 %520
  %v522 = vsel %vm452, %v500, 0.0
  %523 = vadd.xlane.f32.xlu0 %v522
  %v524 = vpop.xlane.xlu0 %523
  %v525 = vlog2.pop %v503
  %v526 = vmul.f32 %v525, 0.6931472
  %v527 = vlog2.pop %v506
  %v528 = vmul.f32 %v527, 0.6931472
  %v529 = vlog2.pop %v509
  %v530 = vmul.f32 %v529, 0.6931472
  %v531 = vlog2.pop %v512
  %v532 = vmul.f32 %v531, 0.6931472
  %v533 = vlog2.pop %v515
  %v534 = vmul.f32 %v533, 0.6931472
  %v535 = vlog2.pop %v518
  %v536 = vmul.f32 %v535, 0.6931472
  %v537 = vlog2.pop %v521
  %v538 = vmul.f32 %v537, 0.6931472
  %v539 = vlog2.pop %v524
  %v540 = vmul.f32 %v539, 0.6931472
  %v541 = vadd.f32 %v455, %v526
  %v542 = vadd.f32 %v458, %v528
  %v543 = vadd.f32 %v461, %v530
  %v544 = vadd.f32 %v464, %v532
  %v545 = vadd.f32 %v467, %v534
  %v546 = vadd.f32 %v470, %v536
  %v547 = vadd.f32 %v473, %v538
  %v548 = vadd.f32 %v476, %v540
  %v549 = vmul.f32 %v541, 0.01
  %v550 = vmul.f32 %v542, 0.01
  %v551 = vmul.f32 %v543, 0.01
  %v552 = vmul.f32 %v544, 0.01
  %v553 = vmul.f32 %v545, 0.01
  %v554 = vmul.f32 %v546, 0.01
  %v555 = vmul.f32 %v547, 0.01
  %v556 = vmul.f32 %v548, 0.01
  %v565 = vlaneseq
  %v566 = vand.u32 %v565, 127
  %v567 = vperm.slane %v549, %v566
  %v568 = vperm.slane %v550, %v566
  %v569 = vperm.slane %v551, %v566
  %v570 = vperm.slane %v552, %v566
  %v571 = vperm.slane %v553, %v566
  %v572 = vperm.slane %v554, %v566
  %v573 = vperm.slane %v555, %v566
  %v574 = vperm.slane %v556, %v566
  %vm575 = vcmask 1041409
  %v576 = vsel %vm575, %v568, %v567
  %vm577 = vcmask 1042434
  %v578 = vsel %vm577, %v569, %v576
  %vm579 = vcmask 1043459
  %v580 = vsel %vm579, %v570, %v578
  %vm581 = vcmask 1044484
  %v582 = vsel %vm581, %v571, %v580
  %vm583 = vcmask 1045509
  %v584 = vsel %vm583, %v572, %v582
  %vm585 = vcmask 1046534
  %v586 = vsel %vm585, %v573, %v584
  %vm587 = vcmask 1047559
  %v588 = vsel %vm587, %v574, %v586
  %v590 = vsel %vm349, %v588, -inf
  %591 = vmax.xlane.f32.xlu0 %v590
  %v592 = vpop.xlane.xlu0 %591
  %v594 = vperm.slane %v592, 0
  %v595 = vperm.slane %v592, 1
  %v596 = vperm.slane %v592, 2
  %v597 = vperm.slane %v592, 3
  %v598 = vperm.slane %v592, 4
  %v599 = vperm.slane %v592, 5
  %v600 = vperm.slane %v592, 6
  %v601 = vperm.slane %v592, 7
  %v610 = vsub.f32 %v549, %v594
  %v611 = vsub.f32 %v550, %v595
  %v612 = vsub.f32 %v551, %v596
  %v613 = vsub.f32 %v552, %v597
  %v614 = vsub.f32 %v553, %v598
  %v615 = vsub.f32 %v554, %v599
  %v616 = vsub.f32 %v555, %v600
  %v617 = vsub.f32 %v556, %v601
  %v618 = vmul.f32 %v610, 1.442695
  %v619 = vpow.pop %v618
  %v620 = vmul.f32 %v611, 1.442695
  %v621 = vpow.pop %v620
  %v622 = vmul.f32 %v612, 1.442695
  %v623 = vpow.pop %v622
  %v624 = vmul.f32 %v613, 1.442695
  %v625 = vpow.pop %v624
  %v626 = vmul.f32 %v614, 1.442695
  %v627 = vpow.pop %v626
  %v628 = vmul.f32 %v615, 1.442695
  %v629 = vpow.pop %v628
  %v630 = vmul.f32 %v616, 1.442695
  %v631 = vpow.pop %v630
  %v632 = vmul.f32 %v617, 1.442695
  %v633 = vpow.pop %v632
  %642 = vset.pattern.permute.xlu0 0
  %643 = vperm.xlu0 %642, %v619
  %v644 = vpop.permute.xlu0 %643
  %645 = vset.pattern.permute.xlu0 0
  %646 = vperm.xlu0 %645, %v621
  %v647 = vpop.permute.xlu0 %646
  %648 = vset.pattern.permute.xlu0 0
  %649 = vperm.xlu0 %648, %v623
  %v650 = vpop.permute.xlu0 %649
  %651 = vset.pattern.permute.xlu0 0
  %652 = vperm.xlu0 %651, %v625
  %v653 = vpop.permute.xlu0 %652
  %654 = vset.pattern.permute.xlu0 0
  %655 = vperm.xlu0 %654, %v627
  %v656 = vpop.permute.xlu0 %655
  %657 = vset.pattern.permute.xlu0 0
  %658 = vperm.xlu0 %657, %v629
  %v659 = vpop.permute.xlu0 %658
  %660 = vset.pattern.permute.xlu0 0
  %661 = vperm.xlu0 %660, %v631
  %v662 = vpop.permute.xlu0 %661
  %663 = vset.pattern.permute.xlu0 0
  %664 = vperm.xlu0 %663, %v633
  %v665 = vpop.permute.xlu0 %664
  %v666 = vperm.slane %v644, %v566
  %v667 = vperm.slane %v647, %v566
  %v668 = vperm.slane %v650, %v566
  %v669 = vperm.slane %v653, %v566
  %v670 = vperm.slane %v656, %v566
  %v671 = vperm.slane %v659, %v566
  %v672 = vperm.slane %v662, %v566
  %v673 = vperm.slane %v665, %v566
  %v674 = vsel %vm575, %v667, %v666
  %v675 = vsel %vm577, %v668, %v674
  %v676 = vsel %vm579, %v669, %v675
  %v677 = vsel %vm581, %v670, %v676
  %v678 = vsel %vm583, %v671, %v677
  %v679 = vsel %vm585, %v672, %v678
  %v680 = vsel %vm587, %v673, %v679
  %v682 = vsel %vm349, %v680, 0.0
  %683 = vadd.xlane.f32.xlu0 %v682
  %v684 = vpop.xlane.xlu0 %683
  %v686 = vperm.slane %v684, 0
  %v687 = vperm.slane %v684, 1
  %v688 = vperm.slane %v684, 2
  %v689 = vperm.slane %v684, 3
  %v690 = vperm.slane %v684, 4
  %v691 = vperm.slane %v684, 5
  %v692 = vperm.slane %v684, 6
  %v693 = vperm.slane %v684, 7
  %v702 = vrcp.pop %v686
  %v703 = vmul.f32 %v686, %v702
  %v704 = vsub.f32 1.0, %v703
  %v705 = vmul.f32 %v702, %v704
  %v706 = vadd.f32 %v702, %v705
  %vm707 = vweird.f32 %v686
  %vm708 = vweird.f32 %v702
  %vm709 = vmor %vm707, %vm708
  %v710 = vsel %vm709, %v702, %v706
  %v711 = vand.u32 2147483647, %v686
  %vm712 = vcmp.eq.f32.partialorder %v711, 8.507059e+37
  %v713 = vand.u32 %v686, 2147483648
  %v714 = vor.u32 1.1754944e-38, %v713
  %v715 = vsel %vm712, %v714, %v710
  %v716 = vmul.f32 %v619, %v715
  %v717 = vrcp.pop %v687
  %v718 = vmul.f32 %v687, %v717
  %v719 = vsub.f32 1.0, %v718
  %v720 = vmul.f32 %v717, %v719
  %v721 = vadd.f32 %v717, %v720
  %vm722 = vweird.f32 %v687
  %vm723 = vweird.f32 %v717
  %vm724 = vmor %vm722, %vm723
  %v725 = vsel %vm724, %v717, %v721
  %v726 = vand.u32 2147483647, %v687
  %vm727 = vcmp.eq.f32.partialorder %v726, 8.507059e+37
  %v728 = vand.u32 %v687, 2147483648
  %v729 = vor.u32 1.1754944e-38, %v728
  %v730 = vsel %vm727, %v729, %v725
  %v731 = vmul.f32 %v621, %v730
  %v732 = vrcp.pop %v688
  %v733 = vmul.f32 %v688, %v732
  %v734 = vsub.f32 1.0, %v733
  %v735 = vmul.f32 %v732, %v734
  %v736 = vadd.f32 %v732, %v735
  %vm737 = vweird.f32 %v688
  %vm738 = vweird.f32 %v732
  %vm739 = vmor %vm737, %vm738
  %v740 = vsel %vm739, %v732, %v736
  %v741 = vand.u32 2147483647, %v688
  %vm742 = vcmp.eq.f32.partialorder %v741, 8.507059e+37
  %v743 = vand.u32 %v688, 2147483648
  %v744 = vor.u32 1.1754944e-38, %v743
  %v745 = vsel %vm742, %v744, %v740
  %v746 = vmul.f32 %v623, %v745
  %v747 = vrcp.pop %v689
  %v748 = vmul.f32 %v689, %v747
  %v749 = vsub.f32 1.0, %v748
  %v750 = vmul.f32 %v747, %v749
  %v751 = vadd.f32 %v747, %v750
  %vm752 = vweird.f32 %v689
  %vm753 = vweird.f32 %v747
  %vm754 = vmor %vm752, %vm753
  %v755 = vsel %vm754, %v747, %v751
  %v756 = vand.u32 2147483647, %v689
  %vm757 = vcmp.eq.f32.partialorder %v756, 8.507059e+37
  %v758 = vand.u32 %v689, 2147483648
  %v759 = vor.u32 1.1754944e-38, %v758
  %v760 = vsel %vm757, %v759, %v755
  %v761 = vmul.f32 %v625, %v760
  %v762 = vrcp.pop %v690
  %v763 = vmul.f32 %v690, %v762
  %v764 = vsub.f32 1.0, %v763
  %v765 = vmul.f32 %v762, %v764
  %v766 = vadd.f32 %v762, %v765
  %vm767 = vweird.f32 %v690
  %vm768 = vweird.f32 %v762
  %vm769 = vmor %vm767, %vm768
  %v770 = vsel %vm769, %v762, %v766
  %v771 = vand.u32 2147483647, %v690
  %vm772 = vcmp.eq.f32.partialorder %v771, 8.507059e+37
  %v773 = vand.u32 %v690, 2147483648
  %v774 = vor.u32 1.1754944e-38, %v773
  %v775 = vsel %vm772, %v774, %v770
  %v776 = vmul.f32 %v627, %v775
  %v777 = vrcp.pop %v691
  %v778 = vmul.f32 %v691, %v777
  %v779 = vsub.f32 1.0, %v778
  %v780 = vmul.f32 %v777, %v779
  %v781 = vadd.f32 %v777, %v780
  %vm782 = vweird.f32 %v691
  %vm783 = vweird.f32 %v777
  %vm784 = vmor %vm782, %vm783
  %v785 = vsel %vm784, %v777, %v781
  %v786 = vand.u32 2147483647, %v691
  %vm787 = vcmp.eq.f32.partialorder %v786, 8.507059e+37
  %v788 = vand.u32 %v691, 2147483648
  %v789 = vor.u32 1.1754944e-38, %v788
  %v790 = vsel %vm787, %v789, %v785
  %v791 = vmul.f32 %v629, %v790
  %v792 = vrcp.pop %v692
  %v793 = vmul.f32 %v692, %v792
  %v794 = vsub.f32 1.0, %v793
  %v795 = vmul.f32 %v792, %v794
  %v796 = vadd.f32 %v792, %v795
  %vm797 = vweird.f32 %v692
  %vm798 = vweird.f32 %v792
  %vm799 = vmor %vm797, %vm798
  %v800 = vsel %vm799, %v792, %v796
  %v801 = vand.u32 2147483647, %v692
  %vm802 = vcmp.eq.f32.partialorder %v801, 8.507059e+37
  %v803 = vand.u32 %v692, 2147483648
  %v804 = vor.u32 1.1754944e-38, %v803
  %v805 = vsel %vm802, %v804, %v800
  %v806 = vmul.f32 %v631, %v805
  %v807 = vrcp.pop %v693
  %v808 = vmul.f32 %v693, %v807
  %v809 = vsub.f32 1.0, %v808
  %v810 = vmul.f32 %v807, %v809
  %v811 = vadd.f32 %v807, %v810
  %vm812 = vweird.f32 %v693
  %vm813 = vweird.f32 %v807
  %vm814 = vmor %vm812, %vm813
  %v815 = vsel %vm814, %v807, %v811
  %v816 = vand.u32 2147483647, %v693
  %vm817 = vcmp.eq.f32.partialorder %v816, 8.507059e+37
  %v818 = vand.u32 %v693, 2147483648
  %v819 = vor.u32 1.1754944e-38, %v818
  %v820 = vsel %vm817, %v819, %v815
  %v821 = vmul.f32 %v633, %v820
  %vm822 = vcmask 72760
  %v823 = vsel %vm822, %v415, -inf
  %824 = vmax.xlane.f32.xlu0 %v823
  %v825 = vpop.xlane.xlu0 %824
  %v826 = vsub.f32 %v415, %v825
  %v827 = vmul.f32 %v826, 1.442695
  %v828 = vpow.pop %v827
  %830 = vrot.lane.b32.xlu0 %v828, 121
  %v831 = vpop.permute.xlu0 %830
  %vm833 = vcmask 15360
  %v834 = vsel %vm833, %v831, 0.0
  %835 = vadd.xlane.f32.xlu0 %v834
  %v836 = vpop.xlane.xlu0 %835
  %v837 = vrcp.pop %v836
  %v838 = vmul.f32 %v836, %v837
  %v839 = vsub.f32 1.0, %v838
  %v840 = vmul.f32 %v837, %v839
  %v841 = vadd.f32 %v837, %v840
  %vm842 = vweird.f32 %v836
  %vm843 = vweird.f32 %v837
  %vm844 = vmor %vm842, %vm843
  %v845 = vsel %vm844, %v837, %v841
  %v846 = vand.u32 2147483647, %v836
  %vm847 = vcmp.eq.f32.partialorder %v846, 8.507059e+37
  %v848 = vand.u32 %v836, 2147483648
  %v849 = vor.u32 1.1754944e-38, %v848
  %v850 = vsel %vm847, %v849, %v845
  %v851 = vmul.f32 %v828, %v850
  %v852 = vmax.f32 %v851, 0.01
  %v853 = vmin.f32 %v852, 0.99
  %v854 = vsub.f32 1.0, %v853
  %v855 = vrcp.pop %v854
  %v856 = vmul.f32 %v854, %v855
  %v857 = vsub.f32 1.0, %v856
  %v858 = vmul.f32 %v855, %v857
  %v859 = vadd.f32 %v855, %v858
  %vm860 = vweird.f32 %v854
  %vm861 = vweird.f32 %v855
  %vm862 = vmor %vm860, %vm861
  %v863 = vsel %vm862, %v855, %v859
  %v864 = vand.u32 2147483647, %v854
  %vm865 = vcmp.eq.f32.partialorder %v864, 8.507059e+37
  %v866 = vand.u32 %v854, 2147483648
  %v867 = vor.u32 1.1754944e-38, %v866
  %v868 = vsel %vm865, %v867, %v863
  %v869 = vmul.f32 %v853, %v868
  %871 = vrot.lane.b32.xlu0 %v869, 121
  %v872 = vpop.permute.xlu0 %871
  %v874 = vsel %vm833, %v872, 0.0
  %875 = vadd.xlane.f32.xlu0 %v874
  %v876 = vpop.xlane.xlu0 %875
  %v877 = vrcp.pop %v876
  %v878 = vmul.f32 %v876, %v877
  %v879 = vsub.f32 1.0, %v878
  %v880 = vmul.f32 %v877, %v879
  %v881 = vadd.f32 %v877, %v880
  %vm882 = vweird.f32 %v876
  %vm883 = vweird.f32 %v877
  %vm884 = vmor %vm882, %vm883
  %v885 = vsel %vm884, %v877, %v881
  %v886 = vand.u32 2147483647, %v876
  %vm887 = vcmp.eq.f32.partialorder %v886, 8.507059e+37
  %v888 = vand.u32 %v876, 2147483648
  %v889 = vor.u32 1.1754944e-38, %v888
  %v890 = vsel %vm887, %v889, %v885
  %v891 = vmul.f32 %v869, %v890
  %893 = vset.pattern.permute.xlu0 7
  %894 = vperm.xlu0 %893, %v891
  %v895 = vpop.permute.xlu0 %894
  %v897 = vmul.f32 %v895, %v373
  %898 = vset.pattern.permute.xlu0 8
  %899 = vperm.xlu0 %898, %v891
  %v900 = vpop.permute.xlu0 %899
  %910 = vset.pattern.permute.xlu0 0
  %911 = vperm.xlu0 %910, %v716
  %v912 = vpop.permute.xlu0 %911
  %913 = vset.pattern.permute.xlu0 0
  %914 = vperm.xlu0 %913, %v731
  %v915 = vpop.permute.xlu0 %914
  %916 = vset.pattern.permute.xlu0 0
  %917 = vperm.xlu0 %916, %v746
  %v918 = vpop.permute.xlu0 %917
  %919 = vset.pattern.permute.xlu0 0
  %920 = vperm.xlu0 %919, %v761
  %v921 = vpop.permute.xlu0 %920
  %922 = vset.pattern.permute.xlu0 0
  %923 = vperm.xlu0 %922, %v776
  %v924 = vpop.permute.xlu0 %923
  %925 = vset.pattern.permute.xlu0 0
  %926 = vperm.xlu0 %925, %v791
  %v927 = vpop.permute.xlu0 %926
  %928 = vset.pattern.permute.xlu0 0
  %929 = vperm.xlu0 %928, %v806
  %v930 = vpop.permute.xlu0 %929
  %931 = vset.pattern.permute.xlu0 0
  %932 = vperm.xlu0 %931, %v821
  %v933 = vpop.permute.xlu0 %932
  %v934 = vperm.slane %v912, %v566
  %v935 = vperm.slane %v915, %v566
  %v936 = vperm.slane %v918, %v566
  %v937 = vperm.slane %v921, %v566
  %v938 = vperm.slane %v924, %v566
  %v939 = vperm.slane %v927, %v566
  %v940 = vperm.slane %v930, %v566
  %v941 = vperm.slane %v933, %v566
  %v942 = vsel %vm575, %v935, %v934
  %v943 = vsel %vm577, %v936, %v942
  %v944 = vsel %vm579, %v937, %v943
  %v945 = vsel %vm581, %v938, %v944
  %v946 = vsel %vm583, %v939, %v945
  %v947 = vsel %vm585, %v940, %v946
  %v948 = vsel %vm587, %v941, %v947
  %v950 = vmul.f32 %v900, %v948
  %v951 = vadd.f32 %v897, %v950
  %952 = vrot.lane.b32.xlu0 %v891, 1
  %v953 = vpop.permute.xlu0 %952
  %v955 = vsel %vm349, %v951, %v953
  %vm956 = vcmask 80896
  %v957 = vsel %vm956, %v955, 0.0
  %958 = vst [vmem:[%s4] sm:$0xff] %v957
  // Predicated region
  $region18: #{blender_actor_forward.1} parent=0 // pred_check
    _
  $region19: #{blender_actor_forward.1} parent=0 // pred_check_branch
    %960 = sbr.rel (0) target = $region21
  $region20: #{blender_actor_forward.1} parent=0 // pred_region
    _
  $region21: #{blender_actor_forward.1} parent=0 // pred_fallthru
    _
  // Predicated region
  $region22: #{blender_actor_forward.1} parent=0 // pred_check
    _
  $region23: #{blender_actor_forward.1} parent=0 // pred_check_branch
    %962 = sbr.rel (0) target = $region25
  $region24: #{blender_actor_forward.1} parent=0 // pred_region
    _
  $region25: #{blender_actor_forward.1} parent=0 // pred_fallthru
    _

</llo_original>
